<compile_context>
chip_gen: v7x
topology: tpu7x:2x2x1
jax: 0.10.0
libtpu: 0.0.40
codegen_flags: <defaults>
</compile_context>

<pallas_src>
import jax
import jax.numpy as jnp
from jax.experimental import pallas as pl
from jax.experimental.pallas import tpu as pltpu


def _conv1x1_tanh_kernel(w_ref, x_ref, o_ref):
    # w_ref: (Cout, Cin) f32 scalar table in SMEM
    # x_ref: (Bt, Cin, S, 128) f32 tile in VMEM -- x_ref[:, i] is (8,128)-dense
    # o_ref: (Bt, Cout, S, 128) f32 tile in VMEM
    cin = x_ref.shape[1]
    cout = o_ref.shape[1]
    xs = [x_ref[:, i, :, :] for i in range(cin)]      # hoisted dense channel loads
    for o in range(cout):                              # Cout*Cin broadcast FMAs (VPU)
        acc = w_ref[o, 0] * xs[0]
        for i in range(1, cin):
            acc = acc + w_ref[o, i] * xs[i]
        o_ref[:, o, :, :] = jnp.tanh(acc)              # tanh on EUP, direct store


def _select_tiles(n, s_total, cin, cout, itemsize,
                  target_in_bytes, vmem_budget_bytes):
    """Pick (batches per step, 128-lane row blocks per step)."""
    lane = 128
    bytes_per_point = (cin + cout) * itemsize                       # in + out
    max_points = max(lane, vmem_budget_bytes // (2 * bytes_per_point))  # dbl-buffered
    tgt_points = max(lane, min(target_in_bytes // (cin * itemsize), max_points))
    tgt_rows = max(1, tgt_points // lane)                           # rows of 128 pts

    if s_total <= tgt_rows:
        # Small images: take the whole (padded) spatial extent, block over batch.
        s_blk = s_total
        b_t = max(1, min(n, tgt_rows // s_total))
        if n > 1:                                   # keep >=2 grid steps for v7x
            b_t = min(b_t, pl.cdiv(n, 2))
    else:
        # Large images: one batch per step, big spatial tile (multiple of 8 rows).
        b_t = 1
        s_blk = min(max(8, (tgt_rows // 8) * 8), s_total)
    return b_t, s_blk


def final_output(x_nchw, weight_oihw, *,
                 target_in_bytes=2 << 20, vmem_budget_bytes=12 << 20):
    """FinalOutput.forward: Conv2d(Cin, Cout, 1, 1, 0, bias=False) -> Tanh.

    x_nchw:      (N, Cin, H, W)    float32
    weight_oihw: (Cout, Cin, 1, 1) float32 (PyTorch conv weight layout)
    returns:     (N, Cout, H, W)   float32
    """
    n, cin, h, w = x_nchw.shape
    cout = weight_oihw.shape[0]
    hw = h * w
    lane = 128

    hw_pad = ((hw + lane - 1) // lane) * lane
    s_total = hw_pad // lane

    # Free reshape to NCHW slab; pad spatial only if HW is not a 128-multiple.
    x3 = x_nchw.reshape(n, cin, hw)
    if hw_pad != hw:
        x3 = jnp.pad(x3, ((0, 0), (0, 0), (0, hw_pad - hw)))
    x4 = x3.reshape(n, cin, s_total, lane)            # (N, Cin, S, 128) -- free
    w_mat = weight_oihw.reshape(cout, cin)            # (Cout, Cin)

    itemsize = jnp.dtype(x_nchw.dtype).itemsize
    b_t, s_blk = _select_tiles(n, s_total, cin, cout, itemsize,
                               target_in_bytes, vmem_budget_bytes)
    grid = (pl.cdiv(n, b_t), pl.cdiv(s_total, s_blk))

    cost = pl.CostEstimate(
        flops=2 * n * hw * cin * cout,
        transcendentals=n * hw * cout,
        bytes_accessed=itemsize * (n * hw * (cin + cout) + cin * cout),
    )

    out4 = pl.pallas_call(
        _conv1x1_tanh_kernel,
        out_shape=jax.ShapeDtypeStruct((n, cout, s_total, lane), x_nchw.dtype),
        grid_spec=pltpu.PrefetchScalarGridSpec(
            num_scalar_prefetch=0,
            grid=grid,
            in_specs=[
                # whole weight table lives in SMEM (scalars for VPU FMAs)
                pl.BlockSpec(memory_space=pltpu.MemorySpace.SMEM),
                # NCHW-native input tile: b_t batches, all channels, spatial tile j
                pl.BlockSpec((b_t, cin, s_blk, lane), lambda b, j: (b, 0, j, 0)),
            ],
            out_specs=pl.BlockSpec((b_t, cout, s_blk, lane),
                                   lambda b, j: (b, 0, j, 0)),
        ),
        compiler_params=pltpu.CompilerParams(
            dimension_semantics=("parallel", "parallel"),
            vmem_limit_bytes=32 << 20),
        cost_estimate=cost,
    )(w_mat, x4)

    out3 = out4.reshape(n, cout, hw_pad)
    if hw_pad != hw:
        out3 = out3[:, :, :hw]
    return out3.reshape(n, cout, h, w)


if __name__ == "__main__":
    key = jax.random.PRNGKey(0)
    k_x, k_w = jax.random.split(key)

    # Small shapes consistent with the module: batch=2, in_channels=4,
    # out_channels=3 (RGB "final output" head), spatial=16x16.
    N, CIN, COUT, H, W = 2, 4, 3, 16, 16

    x = jax.random.normal(k_x, (N, CIN, H, W), dtype=jnp.float32)
    bound = 1.0 / jnp.sqrt(jnp.float32(CIN))
    weight = jax.random.uniform(k_w, (COUT, CIN, 1, 1), dtype=jnp.float32,
                                minval=-bound, maxval=bound)

    out = final_output(x, weight)
    jax.block_until_ready(out)

    # Sanity check against a pure-JAX reference.
    ref = jnp.tanh(jnp.einsum("nihw,oi->nohw", x, weight[:, :, 0, 0]))
    assert out.shape == (N, COUT, H, W)
    assert jnp.max(jnp.abs(out - ref)) < 1e-5

    print("KERNEL_OK")
</pallas_src>

<mosaic_0001>
module attributes {stable_mosaic.version = 11 : i64} {
  func.func @_conv1x1_tanh_kernel(%arg0: i32, %arg1: i32, %arg2: memref<3x4xf32, #tpu.memory_space<smem>>, %arg3: memref<1x4x2x128xf32, #tpu.memory_space<vmem>>, %arg4: memref<1x3x2x128xf32, #tpu.memory_space<vmem>>) attributes {dimension_semantics = [#tpu.dimension_semantics<parallel>, #tpu.dimension_semantics<parallel>], iteration_bounds = array<i64: 2, 1>, scalar_prefetch = 0 : i64, scratch_operands = 0 : i64, tpu.core_type = #tpu.core_type<tc>, window_params = [{transform_indices = @transform_0, window_bounds = array<i64: 3, 4>}, {transform_indices = @transform_1, window_bounds = array<i64: 1, 4, 2, 128>}, {transform_indices = @transform_2, window_bounds = array<i64: 1, 3, 2, 128>}]} {
    %c0 = arith.constant 0 : index
    %c0_0 = arith.constant 0 : index
    %c0_1 = arith.constant 0 : index
    %c0_2 = arith.constant 0 : index
    %0 = vector.load %arg3[%c0, %c0_0, %c0_1, %c0_2] : memref<1x4x2x128xf32, #tpu.memory_space<vmem>>, vector<1x1x2x128xf32>
    %1 = vector.shape_cast %0 : vector<1x1x2x128xf32> to vector<1x2x128xf32>
    %c0_3 = arith.constant 0 : index
    %c1 = arith.constant 1 : index
    %c0_4 = arith.constant 0 : index
    %c0_5 = arith.constant 0 : index
    %2 = vector.load %arg3[%c0_3, %c1, %c0_4, %c0_5] : memref<1x4x2x128xf32, #tpu.memory_space<vmem>>, vector<1x1x2x128xf32>
    %3 = vector.shape_cast %2 : vector<1x1x2x128xf32> to vector<1x2x128xf32>
    %c0_6 = arith.constant 0 : index
    %c2 = arith.constant 2 : index
    %c0_7 = arith.constant 0 : index
    %c0_8 = arith.constant 0 : index
    %4 = vector.load %arg3[%c0_6, %c2, %c0_7, %c0_8] : memref<1x4x2x128xf32, #tpu.memory_space<vmem>>, vector<1x1x2x128xf32>
    %5 = vector.shape_cast %4 : vector<1x1x2x128xf32> to vector<1x2x128xf32>
    %c0_9 = arith.constant 0 : index
    %c3 = arith.constant 3 : index
    %c0_10 = arith.constant 0 : index
    %c0_11 = arith.constant 0 : index
    %6 = vector.load %arg3[%c0_9, %c3, %c0_10, %c0_11] : memref<1x4x2x128xf32, #tpu.memory_space<vmem>>, vector<1x1x2x128xf32>
    %7 = vector.shape_cast %6 : vector<1x1x2x128xf32> to vector<1x2x128xf32>
    %c0_12 = arith.constant 0 : index
    %c0_13 = arith.constant 0 : index
    %8 = memref.load %arg2[%c0_12, %c0_13] : memref<3x4xf32, #tpu.memory_space<smem>>
    %9 = vector.broadcast %8 : f32 to vector<1x2x128xf32>
    %10 = arith.mulf %9, %1 : vector<1x2x128xf32>
    %c0_14 = arith.constant 0 : index
    %c1_15 = arith.constant 1 : index
    %11 = memref.load %arg2[%c0_14, %c1_15] : memref<3x4xf32, #tpu.memory_space<smem>>
    %12 = vector.broadcast %11 : f32 to vector<1x2x128xf32>
    %13 = arith.mulf %12, %3 : vector<1x2x128xf32>
    %14 = arith.addf %10, %13 : vector<1x2x128xf32>
    %c0_16 = arith.constant 0 : index
    %c2_17 = arith.constant 2 : index
    %15 = memref.load %arg2[%c0_16, %c2_17] : memref<3x4xf32, #tpu.memory_space<smem>>
    %16 = vector.broadcast %15 : f32 to vector<1x2x128xf32>
    %17 = arith.mulf %16, %5 : vector<1x2x128xf32>
    %18 = arith.addf %14, %17 : vector<1x2x128xf32>
    %c0_18 = arith.constant 0 : index
    %c3_19 = arith.constant 3 : index
    %19 = memref.load %arg2[%c0_18, %c3_19] : memref<3x4xf32, #tpu.memory_space<smem>>
    %20 = vector.broadcast %19 : f32 to vector<1x2x128xf32>
    %21 = arith.mulf %20, %7 : vector<1x2x128xf32>
    %22 = arith.addf %18, %21 : vector<1x2x128xf32>
    %23 = math.tanh %22 : vector<1x2x128xf32>
    %c0_20 = arith.constant 0 : index
    %c0_21 = arith.constant 0 : index
    %c0_22 = arith.constant 0 : index
    %c0_23 = arith.constant 0 : index
    %24 = vector.load %arg4[%c0_20, %c0_21, %c0_22, %c0_23] : memref<1x3x2x128xf32, #tpu.memory_space<vmem>>, vector<1x1x2x128xf32>
    %25 = vector.shape_cast %24 : vector<1x1x2x128xf32> to vector<1x2x128xf32>
    %26 = vector.shape_cast %23 : vector<1x2x128xf32> to vector<1x1x2x128xf32>
    tpu.vector_store %arg4[%c0_20, %c0_21, %c0_22, %c0_23], %26 {strides = array<i32>} : memref<1x3x2x128xf32, #tpu.memory_space<vmem>>, vector<1x1x2x128xf32>,
    %c1_24 = arith.constant 1 : index
    %c0_25 = arith.constant 0 : index
    %27 = memref.load %arg2[%c1_24, %c0_25] : memref<3x4xf32, #tpu.memory_space<smem>>
    %28 = vector.broadcast %27 : f32 to vector<1x2x128xf32>
    %29 = arith.mulf %28, %1 : vector<1x2x128xf32>
    %c1_26 = arith.constant 1 : index
    %c1_27 = arith.constant 1 : index
    %30 = memref.load %arg2[%c1_26, %c1_27] : memref<3x4xf32, #tpu.memory_space<smem>>
    %31 = vector.broadcast %30 : f32 to vector<1x2x128xf32>
    %32 = arith.mulf %31, %3 : vector<1x2x128xf32>
    %33 = arith.addf %29, %32 : vector<1x2x128xf32>
    %c1_28 = arith.constant 1 : index
    %c2_29 = arith.constant 2 : index
    %34 = memref.load %arg2[%c1_28, %c2_29] : memref<3x4xf32, #tpu.memory_space<smem>>
    %35 = vector.broadcast %34 : f32 to vector<1x2x128xf32>
    %36 = arith.mulf %35, %5 : vector<1x2x128xf32>
    %37 = arith.addf %33, %36 : vector<1x2x128xf32>
    %c1_30 = arith.constant 1 : index
    %c3_31 = arith.constant 3 : index
    %38 = memref.load %arg2[%c1_30, %c3_31] : memref<3x4xf32, #tpu.memory_space<smem>>
    %39 = vector.broadcast %38 : f32 to vector<1x2x128xf32>
    %40 = arith.mulf %39, %7 : vector<1x2x128xf32>
    %41 = arith.addf %37, %40 : vector<1x2x128xf32>
    %42 = math.tanh %41 : vector<1x2x128xf32>
    %c0_32 = arith.constant 0 : index
    %c1_33 = arith.constant 1 : index
    %c0_34 = arith.constant 0 : index
    %c0_35 = arith.constant 0 : index
    %43 = vector.load %arg4[%c0_32, %c1_33, %c0_34, %c0_35] : memref<1x3x2x128xf32, #tpu.memory_space<vmem>>, vector<1x1x2x128xf32>
    %44 = vector.shape_cast %43 : vector<1x1x2x128xf32> to vector<1x2x128xf32>
    %45 = vector.shape_cast %42 : vector<1x2x128xf32> to vector<1x1x2x128xf32>
    tpu.vector_store %arg4[%c0_32, %c1_33, %c0_34, %c0_35], %45 {strides = array<i32>} : memref<1x3x2x128xf32, #tpu.memory_space<vmem>>, vector<1x1x2x128xf32>,
    %c2_36 = arith.constant 2 : index
    %c0_37 = arith.constant 0 : index
    %46 = memref.load %arg2[%c2_36, %c0_37] : memref<3x4xf32, #tpu.memory_space<smem>>
    %47 = vector.broadcast %46 : f32 to vector<1x2x128xf32>
    %48 = arith.mulf %47, %1 : vector<1x2x128xf32>
    %c2_38 = arith.constant 2 : index
    %c1_39 = arith.constant 1 : index
    %49 = memref.load %arg2[%c2_38, %c1_39] : memref<3x4xf32, #tpu.memory_space<smem>>
    %50 = vector.broadcast %49 : f32 to vector<1x2x128xf32>
    %51 = arith.mulf %50, %3 : vector<1x2x128xf32>
    %52 = arith.addf %48, %51 : vector<1x2x128xf32>
    %c2_40 = arith.constant 2 : index
    %c2_41 = arith.constant 2 : index
    %53 = memref.load %arg2[%c2_40, %c2_41] : memref<3x4xf32, #tpu.memory_space<smem>>
    %54 = vector.broadcast %53 : f32 to vector<1x2x128xf32>
    %55 = arith.mulf %54, %5 : vector<1x2x128xf32>
    %56 = arith.addf %52, %55 : vector<1x2x128xf32>
    %c2_42 = arith.constant 2 : index
    %c3_43 = arith.constant 3 : index
    %57 = memref.load %arg2[%c2_42, %c3_43] : memref<3x4xf32, #tpu.memory_space<smem>>
    %58 = vector.broadcast %57 : f32 to vector<1x2x128xf32>
    %59 = arith.mulf %58, %7 : vector<1x2x128xf32>
    %60 = arith.addf %56, %59 : vector<1x2x128xf32>
    %61 = math.tanh %60 : vector<1x2x128xf32>
    %c0_44 = arith.constant 0 : index
    %c2_45 = arith.constant 2 : index
    %c0_46 = arith.constant 0 : index
    %c0_47 = arith.constant 0 : index
    %62 = vector.load %arg4[%c0_44, %c2_45, %c0_46, %c0_47] : memref<1x3x2x128xf32, #tpu.memory_space<vmem>>, vector<1x1x2x128xf32>
    %63 = vector.shape_cast %62 : vector<1x1x2x128xf32> to vector<1x2x128xf32>
    %64 = vector.shape_cast %61 : vector<1x2x128xf32> to vector<1x1x2x128xf32>
    tpu.vector_store %arg4[%c0_44, %c2_45, %c0_46, %c0_47], %64 {strides = array<i32>} : memref<1x3x2x128xf32, #tpu.memory_space<vmem>>, vector<1x1x2x128xf32>,
    return
  }
  func.func @transform_0(%arg0: i32, %arg1: i32) -> (i32, i32) {
    %c0_i32 = arith.constant 0 : i32
    %c0_i32_0 = arith.constant 0 : i32
    %c0_i32_1 = arith.constant 0 : i32
    return %c0_i32, %c0_i32_0 : i32, i32
  }
  func.func @transform_1(%arg0: i32, %arg1: i32) -> (i32, i32, i32, i32) {
    %c0_i32 = arith.constant 0 : i32
    %c0_i32_0 = arith.constant 0 : i32
    %c0_i32_1 = arith.constant 0 : i32
    return %arg0, %c0_i32, %arg1, %c0_i32_0 : i32, i32, i32, i32
  }
  func.func @transform_2(%arg0: i32, %arg1: i32) -> (i32, i32, i32, i32) {
    %c0_i32 = arith.constant 0 : i32
    %c0_i32_0 = arith.constant 0 : i32
    %c0_i32_1 = arith.constant 0 : i32
    return %arg0, %c0_i32, %arg1, %c0_i32_0 : i32, i32, i32, i32
  }
}

</mosaic_0001>

<llo_original>
// kernel: tpu_custom_call.1
$region0: #{tpu_custom_call.1}
  #allocation0 [shape = 'u32[]', space=smem, size = 0x4, offset = 0x4, fixed_abs, tag = 'smem constant byte address 0x4 - core index']
  #allocation1 [shape = 'u32[144,128]{1,0:T(1,128)}', space=vmem, size = 0x12000, scoped, tag = 'internal scratch']
  %s0 = inlined_call_operand.hbm [shape: f32[3,4], index: 0, kind: input, shape index: {}]
  %s1 = inlined_call_operand.hbm [shape: f32[2,4,2,128], index: 1, kind: input, shape index: {}]
  %s2 = inlined_call_operand.hbm [shape: f32[2,3,2,128], index: 2, kind: output, shape index: {}]
  %s3 = sld [smem:[#allocation0]]
  $region49: #{tpu_custom_call.1} parent=0
    _
  %s5 = ssub.s32 1, %s3
  %s6 = scalar_select 0, %s5, %s3
  $region1: #{tpu_custom_call.1} parent=0
    #allocation2 [shape = 'u8[2048]{0}', space=smem, size = 0x800, scoped, tag = 'input window, operand 0, single buffered']
    #allocation3 [shape = 's32[2]{0}', space=sflag, size = 0x8, scoped, tag = 'scoped memory for tpu_custom_call.1']
    #allocation4 [shape = 's32[2]{0}', space=sflag, size = 0x8, scoped, tag = 'scoped memory for tpu_custom_call.1']
    #allocation5 [shape = 's32[2]{0}', space=sflag, size = 0x8, scoped, tag = 'scoped memory for tpu_custom_call.1']
    #allocation6 [shape = 'u8[8192]{0}', space=vmem, size = 0x2000, scoped, tag = 'input window, operand 1']
    #allocation7 [shape = 'u8[6144]{0}', space=vmem, size = 0x1800, scoped, tag = 'output window, operand 0']
    %7 = vsyncpa [#allocation5], 0
    %8 = vsyncpa [#allocation3], 0
    %s9 = scalar_lea.sflag [#allocation3], 1
    %10 = vsyncpa %s9, 0
    %11 = vsyncpa [#allocation4], 0
    %s12 = scalar_lea.sflag [#allocation4], 1
    %13 = vsyncpa %s12, 0
    loop: start=0, step=1, limit=4
    $region2: #{tpu_custom_call.1} parent=1 // loop_pre_header
      _
    $region3: #{tpu_custom_call.1} parent=1 // loop_header
      %s15 = sphi 0, %s19
      %p16 = scmp.ge.s32.totalorder %s15, 4
      %s22 = sphi 0, %s34
      %s23 = sphi 0, %s30
      %s24 = sphi 0, %s22
      %s25 = sphi 0, %s23
      %s26 = sphi 0, %s24
      %s27 = sphi 0, %s25
      %s35 = sphi 0, %s35
      %s37 = sphi 0, %s35
      %s38 = sphi 0, %s37
      %s52 = sphi 0, %s38
      %s60 = sphi 0, %s62
      %s63 = sphi 0, %s60
      %s64 = sphi 0, %s63
      %s80 = sphi 0, %s64
      %s88 = sphi 0, %s90
      %s91 = sphi 0, %s88
      %s92 = sphi 0, %s91
      %s108 = sphi 0, %s92
    $region4: #{tpu_custom_call.1} parent=1 // loop_header_branch
      %18 = sbr.rel (%p16) target = $region8
    $region5: #{tpu_custom_call.1} parent=1 // loop_body
      %s20 = ssub.s32 %s15, 1
      %s21 = ssub.s32 %s15, 2
      %s28 = sadd.s32 1, %s23
      %p29 = scmp.ge.s32.totalorder %s28, 1
      %s30 = scalar_select %p29, 0, %s28
      %s31 = sadd.s32 1, %s22
      %s32 = scalar_select %p29, %s31, %s22
      %p33 = scmp.ge.s32.totalorder %s32, 2
      %s34 = scalar_select %p33, 0, %s32
      %s36 = sadd.s32 %s35, 1
      %p39 = scmp.eq.s32.totalorder %s15, 1
      %p40 = scmp.ne.s32.totalorder %s35, %s37
      %p41 = scmp.eq.s32.totalorder %s15, 0
      %p42 = por %p40, %p41
      %p43 = scmp.ne.s32.totalorder %s35, %s37
      %p44 = scmp.eq.s32.totalorder %s20, 1
      %p45 = por %p43, %p44
      %p46 = scmp.ne.s32.totalorder %s37, %s38
      %p47 = scmp.eq.s32.totalorder %s20, 0
      %p48 = por %p46, %p47
      %p49 = scmp.ne.s32.totalorder %s37, %s38
      %p50 = scmp.eq.s32.totalorder %s21, 1
      %p51 = por %p49, %p50
      %p53 = scmp.ne.s32.totalorder %s38, %s52
      %p54 = scmp.eq.s32.totalorder %s21, 0
      %p55 = por %p53, %p54
      %s56 = ssub.s32 %s22, %s34
      %s57 = ssub.s32 %s23, %s30
      %s58 = sor.u32 %s56, %s57
      %p59 = scmp.eq.s32.totalorder %s58, 0
      %s61 = sadd.s32 %s60, 1
      %s62 = scalar_select %p59, %s60, %s61
      %p65 = pneg %p59
      %p66 = scmp.eq.s32.totalorder %s15, 1
      %p67 = por %p65, %p66
      %p68 = scmp.ne.s32.totalorder %s60, %s63
      %p69 = scmp.eq.s32.totalorder %s15, 0
      %p70 = por %p68, %p69
      %p71 = scmp.ne.s32.totalorder %s60, %s63
      %p72 = scmp.eq.s32.totalorder %s20, 1
      %p73 = por %p71, %p72
      %p74 = scmp.ne.s32.totalorder %s63, %s64
      %p75 = scmp.eq.s32.totalorder %s20, 0
      %p76 = por %p74, %p75
      %p77 = scmp.ne.s32.totalorder %s63, %s64
      %p78 = scmp.eq.s32.totalorder %s21, 1
      %p79 = por %p77, %p78
      %p81 = scmp.ne.s32.totalorder %s64, %s80
      %p82 = scmp.eq.s32.totalorder %s21, 0
      %p83 = por %p81, %p82
      %s84 = ssub.s32 %s22, %s34
      %s85 = ssub.s32 %s23, %s30
      %s86 = sor.u32 %s84, %s85
      %p87 = scmp.eq.s32.totalorder %s86, 0
      %s89 = sadd.s32 %s88, 1
      %s90 = scalar_select %p87, %s88, %s89
      %p93 = pneg %p87
      %p94 = scmp.eq.s32.totalorder %s15, 1
      %p95 = por %p93, %p94
      %p96 = scmp.ne.s32.totalorder %s88, %s91
      %p97 = scmp.eq.s32.totalorder %s15, 0
      %p98 = por %p96, %p97
      %p99 = scmp.ne.s32.totalorder %s88, %s91
      %p100 = scmp.eq.s32.totalorder %s20, 1
      %p101 = por %p99, %p100
      %p102 = scmp.ne.s32.totalorder %s91, %s92
      %p103 = scmp.eq.s32.totalorder %s20, 0
      %p104 = por %p102, %p103
      %p105 = scmp.ne.s32.totalorder %s91, %s92
      %p106 = scmp.eq.s32.totalorder %s21, 1
      %p107 = por %p105, %p106
      %p109 = scmp.ne.s32.totalorder %s92, %s108
      %p110 = scmp.eq.s32.totalorder %s21, 0
      %p111 = por %p109, %p110
      %p112 = scmp.le.s32.totalorder 1, %s15
      %p113 = scmp.lt.s32.totalorder %s15, 3
      %p114 = pnand %p112, %p113
      %p115 = pneg %p114
      // Predicated region
      $region9: #{tpu_custom_call.1} parent=5 // pred_check
        _
      $region10: #{tpu_custom_call.1} parent=5 // pred_check_branch
        %117 = sbr.rel (%p114) target = $region12
      $region11: #{tpu_custom_call.1} parent=5 // pred_region
        %s118 = ssub.s32 %s15, 1
        // Predicated region
        $region13: #{tpu_custom_call.1} parent=11 // pred_check
          %p119 = pneg %p48
        $region14: #{tpu_custom_call.1} parent=11 // pred_check_branch
          %121 = sbr.rel (%p119) target = $region16
        $region15: #{tpu_custom_call.1} parent=11 // pred_region
          %s123 = ssub.s32 64, 64
          %124 = vsyncadd [#allocation5], %s123
          %127 = dma.hbm_to_smem %s0, 64, [#allocation2], [#allocation5]
        $region16: #{tpu_custom_call.1} parent=11 // pred_fallthru
          _
      $region12: #{tpu_custom_call.1} parent=5 // pred_fallthru
        _
      %p128 = scmp.lt.s32.totalorder %s15, 2
      // Predicated region
      $region17: #{tpu_custom_call.1} parent=5 // pred_check
        %p129 = pneg %p128
      $region18: #{tpu_custom_call.1} parent=5 // pred_check_branch
        %131 = sbr.rel (%p129) target = $region20
      $region19: #{tpu_custom_call.1} parent=5 // pred_region
        // Predicated region
        $region21: #{tpu_custom_call.1} parent=19 // pred_check
          %p132 = pneg %p70
        $region22: #{tpu_custom_call.1} parent=19 // pred_check_branch
          %134 = sbr.rel (%p132) target = $region24
        $region23: #{tpu_custom_call.1} parent=19 // pred_region
          %s135 = sand.u32 %s60, 1
          %s136 = scalar_lea.sflag [#allocation3], %s135
          %s137 = sand.u32 %s60, 1
          %s138 = smul.addr %s137, 8
          %s139 = scalar_lea.vmem [#allocation6], %s138
          %s141 = ssub.s32 128, 128
          %142 = vsyncadd %s136, %s141
          %s143 = smul.addr %s22, 4
          %s144 = sadd.s32 %s23, %s143
          %s145 = smul.addr %s144, 32
          %s146 = scalar_lea.hbm %s1, %s145
          %s147 = sshll.u32 %s139, 4
          %s148 = int_to_ptr.vmem [resolvable:$true] %s147
          %153 = dma.hbm_to_vmem [thread:$0]  %s146, 128, %s148, %s136, 32, 32, 2
        $region24: #{tpu_custom_call.1} parent=19 // pred_fallthru
          _
      $region20: #{tpu_custom_call.1} parent=5 // pred_fallthru
        _
      %p154 = scmp.le.s32.totalorder 1, %s15
      %p155 = scmp.lt.s32.totalorder %s15, 3
      %p156 = pnand %p154, %p155
      %p157 = pneg %p156
      // Predicated region
      $region25: #{tpu_custom_call.1} parent=5 // pred_check
        _
      $region26: #{tpu_custom_call.1} parent=5 // pred_check_branch
        %159 = sbr.rel (%p156) target = $region28
      $region27: #{tpu_custom_call.1} parent=5 // pred_region
        %s160 = ssub.s32 %s15, 1
        // Predicated region
        $region29: #{tpu_custom_call.1} parent=27 // pred_check
          %p161 = pneg %p48
        $region30: #{tpu_custom_call.1} parent=27 // pred_check_branch
          %163 = sbr.rel (%p161) target = $region32
        $region31: #{tpu_custom_call.1} parent=27 // pred_region
          %164 = dma.done [#allocation5], 64
        $region32: #{tpu_custom_call.1} parent=27 // pred_fallthru
          _
        %s165 = sand.u32 %s63, 1
        %s166 = scalar_lea.sflag [#allocation3], %s165
        %s167 = sand.u32 %s63, 1
        %s168 = smul.addr %s167, 8
        %s169 = scalar_lea.vmem [#allocation6], %s168
        // Predicated region
        $region33: #{tpu_custom_call.1} parent=27 // pred_check
          %p170 = pneg %p76
        $region34: #{tpu_custom_call.1} parent=27 // pred_check_branch
          %172 = sbr.rel (%p170) target = $region36
        $region35: #{tpu_custom_call.1} parent=27 // pred_region
          %173 = dma.done %s166, 128
        $region36: #{tpu_custom_call.1} parent=27 // pred_fallthru
          _
        %174 = sfence
        %p175 = pneg %p48
        %p176 = pneg %p45
        %s177 = sand.u32 %s63, 1
        %s178 = scalar_lea.sflag [#allocation3], %s177
        %s179 = sand.u32 %s63, 1
        %s180 = smul.addr %s179, 8
        %s181 = scalar_lea.vmem [#allocation6], %s180
        %p182 = pneg %p76
        %p183 = pneg %p73
        %p184 = pneg %p104
        %p185 = pneg %p101
        %s186 = sand.u32 %s91, 1
        %s187 = scalar_lea.sflag [#allocation4], %s186
        %s188 = sand.u32 %s91, 1
        %s189 = smul.addr %s188, 6
        %s190 = scalar_lea.vmem [#allocation7], %s189
        %v191 = vld [vmem:[%s169] sm:$0x3]
        %s192 = scalar_lea.vmem %s169, 2 [#allocation6]
        %v193 = vld [vmem:[%s192] sm:$0x3]
        %s194 = scalar_lea.vmem %s169, 4 [#allocation6]
        %v195 = vld [vmem:[%s194] sm:$0x3]
        %s196 = scalar_lea.vmem %s169, 6 [#allocation6]
        %v197 = vld [vmem:[%s196] sm:$0x3]
        %s198 = sld [smem:[#allocation2]]
        %v199 = vstv %s198
        %v200 = vmul.f32 %v199, %v191
        %s201 = sld [smem:[#allocation2 + $0x1]]
        %v202 = vstv %s201
        %v203 = vmul.f32 %v202, %v193
        %v204 = vadd.f32 %v200, %v203
        %s205 = sld [smem:[#allocation2 + $0x2]]
        %v206 = vstv %s205
        %v207 = vmul.f32 %v206, %v195
        %v208 = vadd.f32 %v204, %v207
        %s209 = sld [smem:[#allocation2 + $0x3]]
        %v210 = vstv %s209
        %v211 = vmul.f32 %v210, %v197
        %v212 = vadd.f32 %v208, %v211
        %v213 = vtanh.pop %v212
        %214 = vst [vmem:[%s190] sm:$0x3] %v213
        %s215 = sld [smem:[#allocation2 + $0x80]]
        %v216 = vstv %s215
        %v217 = vmul.f32 %v216, %v191
        %s218 = sld [smem:[#allocation2 + $0x81]]
        %v219 = vstv %s218
        %v220 = vmul.f32 %v219, %v193
        %v221 = vadd.f32 %v217, %v220
        %s222 = sld [smem:[#allocation2 + $0x82]]
        %v223 = vstv %s222
        %v224 = vmul.f32 %v223, %v195
        %v225 = vadd.f32 %v221, %v224
        %s226 = sld [smem:[#allocation2 + $0x83]]
        %v227 = vstv %s226
        %v228 = vmul.f32 %v227, %v197
        %v229 = vadd.f32 %v225, %v228
        %v230 = vtanh.pop %v229
        %s231 = scalar_lea.vmem %s190, 2 [#allocation7]
        %232 = vst [vmem:[%s231] sm:$0x3] %v230
        %s233 = sld [smem:[#allocation2 + $0x100]]
        %v234 = vstv %s233
        %v235 = vmul.f32 %v234, %v191
        %s236 = sld [smem:[#allocation2 + $0x101]]
        %v237 = vstv %s236
        %v238 = vmul.f32 %v237, %v193
        %v239 = vadd.f32 %v235, %v238
        %s240 = sld [smem:[#allocation2 + $0x102]]
        %v241 = vstv %s240
        %v242 = vmul.f32 %v241, %v195
        %v243 = vadd.f32 %v239, %v242
        %s244 = sld [smem:[#allocation2 + $0x103]]
        %v245 = vstv %s244
        %v246 = vmul.f32 %v245, %v197
        %v247 = vadd.f32 %v243, %v246
        %v248 = vtanh.pop %v247
        %s249 = scalar_lea.vmem %s190, 4 [#allocation7]
        %250 = vst [vmem:[%s249] sm:$0x3] %v248
        %s251 = sand.u32 %s91, 1
        %s252 = scalar_lea.sflag [#allocation4], %s251
        %s253 = sand.u32 %s91, 1
        %s254 = smul.addr %s253, 6
        %s255 = scalar_lea.vmem [#allocation7], %s254
        // Predicated region
        $region37: #{tpu_custom_call.1} parent=27 // pred_check
          %p256 = pneg %p101
        $region38: #{tpu_custom_call.1} parent=27 // pred_check_branch
          %258 = sbr.rel (%p256) target = $region40
        $region39: #{tpu_custom_call.1} parent=27 // pred_region
          %s260 = ssub.s32 96, 96
          %261 = vsyncadd %s252, %s260
          %s262 = smul.addr %s24, 3
          %s263 = sadd.s32 %s25, %s262
          %s264 = smul.addr %s263, 32
          %s265 = scalar_lea.hbm %s2, %s264
          %s266 = sshll.u32 %s255, 4
          %s267 = int_to_ptr.vmem [resolvable:$true] %s266
          %272 = dma.vmem_to_hbm [thread:$0]  %s267, 96, %s265, %s252, 32, 32, 2
        $region40: #{tpu_custom_call.1} parent=27 // pred_fallthru
          _
      $region28: #{tpu_custom_call.1} parent=5 // pred_fallthru
        _
      %p273 = scmp.le.s32.totalorder 2, %s15
      // Predicated region
      $region41: #{tpu_custom_call.1} parent=5 // pred_check
        %p274 = pneg %p273
      $region42: #{tpu_custom_call.1} parent=5 // pred_check_branch
        %276 = sbr.rel (%p274) target = $region44
      $region43: #{tpu_custom_call.1} parent=5 // pred_region
        %s277 = ssub.s32 %s15, 2
        // Predicated region
        $region45: #{tpu_custom_call.1} parent=43 // pred_check
          %p278 = pneg %p107
        $region46: #{tpu_custom_call.1} parent=43 // pred_check_branch
          %280 = sbr.rel (%p278) target = $region48
        $region47: #{tpu_custom_call.1} parent=43 // pred_region
          %s281 = sand.u32 %s92, 1
          %s282 = scalar_lea.sflag [#allocation4], %s281
          %s283 = sand.u32 %s92, 1
          %s284 = smul.addr %s283, 6
          %s285 = scalar_lea.vmem [#allocation7], %s284
          %286 = dma.done %s282, 96
        $region48: #{tpu_custom_call.1} parent=43 // pred_fallthru
          _
      $region44: #{tpu_custom_call.1} parent=5 // pred_fallthru
        _
    $region6: #{tpu_custom_call.1} parent=1 // loop_footer
      %s19 = sadd.s32 1, %s15
    $region7: #{tpu_custom_call.1} parent=1 // loop_footer_branch
      %14 = sbr.rel target = $region3
    $region8: #{tpu_custom_call.1} parent=1 // loop_exit
      _
    %287 = vsyncpa [#allocation3], 1
    %s288 = scalar_lea.sflag [#allocation3], 1
    %289 = vsyncpa %s288, 1
    %290 = vsyncpa [#allocation4], 1
    %s291 = scalar_lea.sflag [#allocation4], 1
    %292 = vsyncpa %s291, 1
    %293 = vsyncpa [#allocation5], 1
    %s294 = scalar_lea.sflag [#allocation5], 1
    %295 = vsyncpa %s294, 1

</llo_original>
